<compile_context>
chip_gen: v5e
topology: v5e:2x2
jax: 0.10.0
libtpu: 0.0.40
codegen_flags: <defaults>
</compile_context>

<pallas_src>
import math

import jax
import jax.numpy as jnp
from jax.experimental import pallas as pl
from jax.experimental.pallas import tpu as pltpu


def _round_up(x, m):
    return ((x + m - 1) // m) * m


def _cdiv(a, b):
    return -(-a // b)


# ---------------------------------------------------------------------------
# Pallas kernel: fused gate + sigmoid + scale, single pass over x
# ---------------------------------------------------------------------------
def _mva_kernel(x_ref, wg_ref, b_ref, e_ref, o_ref):
    # Per-channel depthwise contraction over the kernel blades expressed as one small
    # MXU matmul: Wg is (C*Bi, C) with <= K nonzeros per column.  f32 operands: the
    # kernel is HBM-bound so the (multi-pass) f32 MXU cost is fully hidden and we keep
    # full gate precision.
    gate = jnp.dot(x_ref[...].astype(jnp.float32), wg_ref[...],
                   preferred_element_type=jnp.float32) + b_ref[...]        # (tile_m, C)
    sig = jax.nn.sigmoid(gate)                                             # EUP exp/recip
    # Broadcast per-channel gate back onto the (channel, blade) lanes via a constant
    # 0/1 expansion matrix -> stays lane-dense, no in-kernel relayout/reshape.
    gexp = jnp.dot(sig, e_ref[...], preferred_element_type=jnp.float32)    # (tile_m, C*Bi)
    # Re-read x from VMEM (cheap vld) instead of keeping an f32 copy live across both matmuls.
    o_ref[...] = (x_ref[...].astype(jnp.float32) * gexp).astype(o_ref.dtype)


def _gated_scale_pallas(x2d, wg, brow, expand):
    """x2d: (M, C*Bi) flat activations; wg: (C*Bi, C) f32; brow: (1, C) f32;
    expand: (C, C*Bi) f32.  Returns (M, C*Bi) in x2d.dtype."""
    M, CB = x2d.shape
    C = wg.shape[1]
    itemsize = jnp.dtype(x2d.dtype).itemsize
    align = max(8, 32 // itemsize)          # sublane quantum: 8 f32, 16 bf16, 32 int8/fp8

    # Generation-aware VMEM sizing (v5e/v6e: 128 MiB, v7x: 64 MiB per TC).
    try:
        vmem_cap = int(pltpu.get_tpu_info().vmem_capacity_bytes)
    except Exception:  # conservative fallback (assume v7x-sized VMEM)
        vmem_cap = 64 * 2**20

    # HBM-bound op: target ~4 MiB row tiles (well past the ~512-row roofline knee) while keeping
    # the double-buffered in+out blocks (+ temps) comfortably inside every generation's VMEM.
    tile_bytes_target = min(4 * 2**20, vmem_cap // 16)
    tile_m = max(align, (tile_bytes_target // (CB * itemsize)) // align * align)
    tile_m = min(tile_m, 8192)
    # Keep >= 2 grid steps when there is enough work so megacore ("parallel") can split the
    # 1-D grid across v7x's two TensorCores.
    if M > 2 * align:
        tile_m = min(tile_m, _round_up(_cdiv(M, 2), align))
    tile_m = min(tile_m, _round_up(M, align))

    # Ragged M: no full-array pad/slice copies -- the last (partial) block is masked by Pallas.
    grid_m = _cdiv(M, tile_m)

    tile_bytes = tile_m * CB * itemsize
    weights_bytes = 4 * (CB * C + C * CB + C)
    # 2x(in+out) double buffers + elementwise/matmul temps + resident weights, with headroom;
    # capped at 3/4 of physical VMEM (32 MiB on v7x, <= 96 MiB on v5e/v6e).
    vmem_limit = int(min(vmem_cap * 3 // 4,
                         max(32 * 2**20, 6 * tile_bytes + weights_bytes + 4 * 2**20)))

    return pl.pallas_call(
        _mva_kernel,
        out_shape=jax.ShapeDtypeStruct((M, CB), x2d.dtype),
        grid_spec=pltpu.PrefetchScalarGridSpec(
            num_scalar_prefetch=0,
            grid=(grid_m,),
            in_specs=[
                pl.BlockSpec((tile_m, CB), lambda i: (i, 0)),   # x rows (streamed)
                pl.BlockSpec((CB, C), lambda i: (0, 0)),        # gate weights (resident)
                pl.BlockSpec((1, C), lambda i: (0, 0)),         # bias row (resident)
                pl.BlockSpec((C, CB), lambda i: (0, 0)),        # expansion matrix (resident)
            ],
            out_specs=pl.BlockSpec((tile_m, CB), lambda i: (i, 0)),
        ),
        compiler_params=pltpu.CompilerParams(
            dimension_semantics=("parallel",),
            vmem_limit_bytes=vmem_limit,
        ),
        cost_estimate=pl.CostEstimate(
            flops=int(4 * M * CB * C + 2 * M * CB),
            transcendentals=int(M * C),
            bytes_accessed=int(2 * M * CB * itemsize + weights_bytes),
        ),
    )(x2d, wg, brow, expand)


# ---------------------------------------------------------------------------
# Module
# ---------------------------------------------------------------------------
class CliffordAlgebraLite:
    """Minimal algebra stand-in: MultiVectorAct.forward only needs blade-index
    bookkeeping (embed/get). The geometric product is never used here."""
    # TODO(synk): full geometric-product tables are not needed for this forward pass.

    def __init__(self, dim):
        self.dim = dim
        self.n_blades = 2 ** dim


class MultiVectorAct:
    def __init__(self, channels, algebra, input_blades, kernel_blades=None,
                 agg="linear", *, key=None):
        self.channels = channels
        self.algebra = algebra
        self.input_blades = tuple(input_blades)
        self.kernel_blades = (tuple(kernel_blades) if kernel_blades is not None
                              else self.input_blades)
        self.agg = agg
        K = len(self.kernel_blades)
        if agg == "linear":
            # nn.Conv1d(channels, channels, kernel_size=K, groups=channels):
            # weight (C, 1, K), bias (C,). kaiming_uniform_(a=sqrt(5)) ->
            # U(-1/sqrt(fan_in), 1/sqrt(fan_in)) with fan_in = (in/groups)*K = K.
            if key is None:
                key = jax.random.PRNGKey(0)
            kw, kb = jax.random.split(key)
            bound = 1.0 / math.sqrt(K)
            self.weight = jax.random.uniform(kw, (channels, K), jnp.float32, -bound, bound)
            self.bias = jax.random.uniform(kb, (channels,), jnp.float32, -bound, bound)
        elif agg in ("sum", "mean"):
            self.weight = None
            self.bias = None
        else:
            raise ValueError(f"Aggregation {agg} not implemented.")
        # Build the constant gate/expansion matrices ONCE (perf review: avoid per-call
        # host-side graph building around the kernel launch).
        self._wg, self._brow, self._expand = self._build_gate_matrices()

    def _build_gate_matrices(self):
        C = self.channels
        Bi = len(self.input_blades)
        K = len(self.kernel_blades)
        # Position of each kernel blade inside the embedded multivector's nonzero slots;
        # kernel blades not in input_blades read zeros after algebra.embed -> drop them.
        sel = [self.input_blades.index(kb) if kb in self.input_blades else -1
               for kb in self.kernel_blades]
        if self.agg == "linear":
            w, b = self.weight, self.bias
        elif self.agg == "sum":
            w, b = jnp.ones((C, K), jnp.float32), jnp.zeros((C,), jnp.float32)
        else:  # mean: divide by K (missing blades still count in the denominator)
            w, b = jnp.full((C, K), 1.0 / K, jnp.float32), jnp.zeros((C,), jnp.float32)
        eye = jnp.eye(C, dtype=jnp.float32)
        wg = jnp.zeros((C, Bi, C), jnp.float32)
        for k, s in enumerate(sel):
            if s >= 0:
                wg = wg.at[:, s, :].add(eye * w[:, k][:, None])
        wg = wg.reshape(C * Bi, C)                                    # f32 (full precision)
        expand = jnp.kron(eye, jnp.ones((1, Bi), jnp.float32))        # (C, C*Bi) 0/1 matrix
        brow = b.reshape(1, C).astype(jnp.float32)
        return wg, brow, expand

    def __call__(self, x):
        # x: (..., channels, len(input_blades))
        C = self.channels
        Bi = len(self.input_blades)
        assert x.shape[-2] == C and x.shape[-1] == Bi, x.shape
        lead = x.shape[:-2]
        # Contiguous, free reshape (no HBM transpose): rows = batch-like dims,
        # lanes = channel-major / blade-minor.
        x2d = x.reshape(-1, C * Bi)
        out = _gated_scale_pallas(x2d, self._wg, self._brow, self._expand)
        return out.reshape(*lead, C, Bi)


# ---------------------------------------------------------------------------
# Pure-JAX literal reference (embed -> gate -> sigmoid scale -> get)
# ---------------------------------------------------------------------------
def multivector_act_reference(x, module):
    nb = module.algebra.n_blades
    ib = jnp.array(module.input_blades)
    kb = jnp.array(module.kernel_blades)
    v = jnp.zeros(x.shape[:-1] + (nb,), jnp.float32).at[..., ib].set(x.astype(jnp.float32))
    kv = v[..., kb]
    if module.agg == "linear":
        gate = jnp.einsum("...ck,ck->...c", kv, module.weight) + module.bias
        gate = gate[..., None]
    elif module.agg == "sum":
        gate = kv.sum(-1, keepdims=True)
    else:
        gate = kv.mean(-1, keepdims=True)
    v = v * jax.nn.sigmoid(gate)
    return v[..., ib].astype(x.dtype)


if __name__ == "__main__":
    key = jax.random.PRNGKey(0)
    kx, kx2, kp = jax.random.split(key, 3)

    algebra = CliffordAlgebraLite(dim=3)       # 8 blades total
    input_blades = (0, 1, 2, 3)                # scalar + vector part
    C = 32

    # (batch=2, points=8, channels=32, blades=4) -> lane-dense rows of C*Bi = 128
    x = jax.random.normal(kx, (2, 8, C, len(input_blades)), dtype=jnp.float32)

    # agg='linear' (default path: learned depthwise gate)
    mod = MultiVectorAct(C, algebra, input_blades, agg="linear", key=kp)
    out = jax.block_until_ready(mod(x))
    ref = multivector_act_reference(x, mod)
    assert out.shape == x.shape and out.dtype == x.dtype
    # Full-f32 path now -> tight tolerance.
    assert jnp.allclose(out, ref, atol=1e-4, rtol=1e-4), float(jnp.max(jnp.abs(out - ref)))

    # Ragged row count (M = 14 rows): exercises the masked partial last block
    # (no full-array pad / slice copies in the ragged-M path anymore).
    x_rag = jax.random.normal(kx2, (2, 7, C, len(input_blades)), dtype=jnp.float32)
    out_r = jax.block_until_ready(mod(x_rag))
    ref_r = multivector_act_reference(x_rag, mod)
    assert out_r.shape == x_rag.shape
    assert jnp.allclose(out_r, ref_r, atol=1e-4, rtol=1e-4)

    # agg='sum', kernel blades partially outside input_blades (exercises zero columns)
    mod2 = MultiVectorAct(C, algebra, input_blades, kernel_blades=(0, 2, 5), agg="sum")
    out2 = jax.block_until_ready(mod2(x))
    ref2 = multivector_act_reference(x, mod2)
    assert jnp.allclose(out2, ref2, atol=1e-4, rtol=1e-4)

    # agg='mean'
    mod3 = MultiVectorAct(C, algebra, input_blades, agg="mean")
    out3 = jax.block_until_ready(mod3(x))
    ref3 = multivector_act_reference(x, mod3)
    assert jnp.allclose(out3, ref3, atol=1e-4, rtol=1e-4)

    print("KERNEL_OK")
</pallas_src>

<mosaic_0001>
module attributes {stable_mosaic.version = 11 : i64} {
  func.func @_mva_kernel(%arg0: i32, %arg1: memref<16x128xf32, #tpu.memory_space<vmem>>, %arg2: memref<128x32xf32, #tpu.memory_space<vmem>>, %arg3: memref<1x32xf32, #tpu.memory_space<vmem>>, %arg4: memref<32x128xf32, #tpu.memory_space<vmem>>, %arg5: memref<16x128xf32, #tpu.memory_space<vmem>>) attributes {dimension_semantics = [#tpu.dimension_semantics<parallel>], iteration_bounds = array<i64: 1>, scalar_prefetch = 0 : i64, scratch_operands = 0 : i64, tpu.core_type = #tpu.core_type<tc>, window_params = [{transform_indices = @transform_0, window_bounds = array<i64: 16, 128>}, {pipeline_mode = #tpu.pipeline_mode<synchronous>, transform_indices = @transform_1, window_bounds = array<i64: 128, 32>}, {pipeline_mode = #tpu.pipeline_mode<synchronous>, transform_indices = @transform_2, window_bounds = array<i64: 1, 32>}, {pipeline_mode = #tpu.pipeline_mode<synchronous>, transform_indices = @transform_3, window_bounds = array<i64: 32, 128>}, {transform_indices = @transform_4, window_bounds = array<i64: 16, 128>}]} {
    %c0 = arith.constant 0 : index
    %c0_0 = arith.constant 0 : index
    %0 = vector.load %arg1[%c0, %c0_0] : memref<16x128xf32, #tpu.memory_space<vmem>>, vector<16x128xf32>
    %c0_1 = arith.constant 0 : index
    %c0_2 = arith.constant 0 : index
    %1 = vector.load %arg2[%c0_1, %c0_2] : memref<128x32xf32, #tpu.memory_space<vmem>>, vector<128x32xf32>
    %cst = arith.constant dense<0.000000e+00> : vector<16x32xf32>
    %2 = tpu.matmul %0, %1, %cst {dimension_numbers = #tpu.dot_dimension_numbers<[1], [0], [0], [1], [0, 0, 1, 1], [], []>} : vector<16x128xf32>, vector<128x32xf32>, vector<16x32xf32> -> vector<16x32xf32>
    %c0_3 = arith.constant 0 : index
    %c0_4 = arith.constant 0 : index
    %3 = vector.load %arg3[%c0_3, %c0_4] : memref<1x32xf32, #tpu.memory_space<vmem>>, vector<1x32xf32>
    %4 = vector.broadcast %3 : vector<1x32xf32> to vector<16x32xf32>
    %5 = arith.addf %2, %4 : vector<16x32xf32>
    %6 = arith.negf %5 : vector<16x32xf32>
    %7 = math.exp %6 : vector<16x32xf32>
    %cst_5 = arith.constant 1.000000e+00 : f32
    %8 = vector.broadcast %cst_5 : f32 to vector<16x32xf32>
    %9 = arith.addf %8, %7 : vector<16x32xf32>
    %10 = arith.divf %8, %9 : vector<16x32xf32>
    %c0_6 = arith.constant 0 : index
    %c0_7 = arith.constant 0 : index
    %11 = vector.load %arg4[%c0_6, %c0_7] : memref<32x128xf32, #tpu.memory_space<vmem>>, vector<32x128xf32>
    %cst_8 = arith.constant dense<0.000000e+00> : vector<16x128xf32>
    %12 = tpu.matmul %10, %11, %cst_8 {dimension_numbers = #tpu.dot_dimension_numbers<[1], [0], [0], [1], [0, 0, 1, 1], [], []>} : vector<16x32xf32>, vector<32x128xf32>, vector<16x128xf32> -> vector<16x128xf32>
    %c0_9 = arith.constant 0 : index
    %c0_10 = arith.constant 0 : index
    %13 = vector.load %arg1[%c0_9, %c0_10] : memref<16x128xf32, #tpu.memory_space<vmem>>, vector<16x128xf32>
    %14 = arith.mulf %13, %12 : vector<16x128xf32>
    %c0_11 = arith.constant 0 : index
    %c0_12 = arith.constant 0 : index
    %15 = vector.load %arg5[%c0_11, %c0_12] : memref<16x128xf32, #tpu.memory_space<vmem>>, vector<16x128xf32>
    tpu.vector_store %arg5[%c0_11, %c0_12], %14 {strides = array<i32>} : memref<16x128xf32, #tpu.memory_space<vmem>>, vector<16x128xf32>,
    return
  }
  func.func @transform_0(%arg0: i32) -> (i32, i32) {
    %c0_i32 = arith.constant 0 : i32
    %c0_i32_0 = arith.constant 0 : i32
    return %arg0, %c0_i32 : i32, i32
  }
  func.func @transform_1(%arg0: i32) -> (i32, i32) {
    %c0_i32 = arith.constant 0 : i32
    %c0_i32_0 = arith.constant 0 : i32
    %c0_i32_1 = arith.constant 0 : i32
    return %c0_i32, %c0_i32_0 : i32, i32
  }
  func.func @transform_2(%arg0: i32) -> (i32, i32) {
    %c0_i32 = arith.constant 0 : i32
    %c0_i32_0 = arith.constant 0 : i32
    %c0_i32_1 = arith.constant 0 : i32
    return %c0_i32, %c0_i32_0 : i32, i32
  }
  func.func @transform_3(%arg0: i32) -> (i32, i32) {
    %c0_i32 = arith.constant 0 : i32
    %c0_i32_0 = arith.constant 0 : i32
    %c0_i32_1 = arith.constant 0 : i32
    return %c0_i32, %c0_i32_0 : i32, i32
  }
  func.func @transform_4(%arg0: i32) -> (i32, i32) {
    %c0_i32 = arith.constant 0 : i32
    %c0_i32_0 = arith.constant 0 : i32
    return %arg0, %c0_i32 : i32, i32
  }
}

</mosaic_0001>

<llo_original>
// kernel: tpu_custom_call.1
$region0: #{tpu_custom_call.1}
  #allocation0 [shape = 'u32[]', space=smem, size = 0x4, offset = 0x4, fixed_abs, tag = 'smem constant byte address 0x4 - core index']
  #allocation1 [shape = 'u32[72,128]{1,0:T(1,128)}', space=vmem, size = 0x9000, scoped, tag = 'internal scratch']
  %s0 = inlined_call_operand.vmem [shape: f32[16,128], index: 0, kind: input, shape index: {}]
  %s1 = inlined_call_operand.vmem [shape: f32[128,32], index: 1, kind: input, shape index: {}]
  %s2 = inlined_call_operand.vmem [shape: f32[1,32], index: 2, kind: input, shape index: {}]
  %s3 = inlined_call_operand.vmem [shape: f32[32,128], index: 3, kind: input, shape index: {}]
  %s4 = inlined_call_operand.hbm [shape: f32[16,128], index: 4, kind: output, shape index: {}]
  %s5 = sld [smem:[#allocation0]]
  $region26: #{tpu_custom_call.1} parent=0
    _
  %s7 = ssub.s32 1, %s5
  %s8 = scalar_select 0, %s7, %s5
  $region1: #{tpu_custom_call.1} parent=0
    #allocation2 [shape = 'u8[8192]{0}', space=vmem, size = 0x2000, scoped, tag = 'output window, operand 0, single buffered']
    #allocation3 [shape = 's32[1]{0}', space=sflag, size = 0x4, scoped, tag = 'scoped memory for tpu_custom_call.1']
    %9 = vsyncpa [#allocation3], 0
    // Predicated region
    $region2: #{tpu_custom_call.1} parent=1 // pred_check
      _
    $region3: #{tpu_custom_call.1} parent=1 // pred_check_branch
      %11 = sbr.rel (0) target = $region5
    $region4: #{tpu_custom_call.1} parent=1 // pred_region
      _
    $region5: #{tpu_custom_call.1} parent=1 // pred_fallthru
      _
    // Predicated region
    $region6: #{tpu_custom_call.1} parent=1 // pred_check
      _
    $region7: #{tpu_custom_call.1} parent=1 // pred_check_branch
      %13 = sbr.rel (0) target = $region9
    $region8: #{tpu_custom_call.1} parent=1 // pred_region
      _
    $region9: #{tpu_custom_call.1} parent=1 // pred_fallthru
      _
    // Predicated region
    $region10: #{tpu_custom_call.1} parent=1 // pred_check
      _
    $region11: #{tpu_custom_call.1} parent=1 // pred_check_branch
      %15 = sbr.rel (0) target = $region13
    $region12: #{tpu_custom_call.1} parent=1 // pred_region
      _
    $region13: #{tpu_custom_call.1} parent=1 // pred_fallthru
      _
    // Predicated region
    $region14: #{tpu_custom_call.1} parent=1 // pred_check
      _
    $region15: #{tpu_custom_call.1} parent=1 // pred_check_branch
      %17 = sbr.rel (0) target = $region17
    $region16: #{tpu_custom_call.1} parent=1 // pred_region
      _
    $region17: #{tpu_custom_call.1} parent=1 // pred_fallthru
      _
    %v18 = vld [vmem:[%s0] sm:$0xff]
    %v19 = vld [vmem:[%s0 + $0x8] sm:$0xff]
    %v20 = vld [vmem:[%s1] sm:$0xff]
    %v21 = vld [vmem:[%s1 + $0x8] sm:$0xff]
    %v22 = vld [vmem:[%s1 + $0x10] sm:$0xff]
    %v23 = vld [vmem:[%s1 + $0x18] sm:$0xff]
    %v24 = vld [vmem:[%s1 + $0x20] sm:$0xff]
    %v25 = vld [vmem:[%s1 + $0x28] sm:$0xff]
    %v26 = vld [vmem:[%s1 + $0x30] sm:$0xff]
    %v27 = vld [vmem:[%s1 + $0x38] sm:$0xff]
    %v28 = vld [vmem:[%s1 + $0x40] sm:$0xff]
    %v29 = vld [vmem:[%s1 + $0x48] sm:$0xff]
    %v30 = vld [vmem:[%s1 + $0x50] sm:$0xff]
    %v31 = vld [vmem:[%s1 + $0x58] sm:$0xff]
    %v32 = vld [vmem:[%s1 + $0x60] sm:$0xff]
    %v33 = vld [vmem:[%s1 + $0x68] sm:$0xff]
    %v34 = vld [vmem:[%s1 + $0x70] sm:$0xff]
    %v35 = vld [vmem:[%s1 + $0x78] sm:$0xff]
    %v36 = vld [vmem:[%s2] sm:$0x1]
    %v38 = vperm.slane %v36, 0
    %40 = vmatpush.msra.mxu0 %v35
    %41 = vmatpush.msra.mxu0 %v34
    %42 = vmatpush.msra.mxu0 %v33
    %43 = vmatpush.msra.mxu0 %v32
    %44 = vmatpush.msra.mxu0 %v31
    %45 = vmatpush.msra.mxu0 %v30
    %46 = vmatpush.msra.mxu0 %v29
    %47 = vmatpush.msra.mxu0 %v28
    %48 = vmatpush.msra.mxu0 %v27
    %49 = vmatpush.msra.mxu0 %v26
    %50 = vmatpush.msra.mxu0 %v25
    %51 = vmatpush.msra.mxu0 %v24
    %52 = vmatpush.msra.mxu0 %v23
    %53 = vmatpush.msra.mxu0 %v22
    %54 = vmatpush.msra.mxu0 %v21
    %55 = vmatpush.msra.mxu0 %v20
    %56 = vmatmul.f32.gmra.mxu0 %v18
    %v57 = vpop.f32.mrf.mxu0
    %v58 = vadd.f32 %v38, %v57
    %59 = vmatmul.f32.gmra.mxu0 %v19
    %v60 = vpop.f32.mrf.mxu0
    %v61 = vadd.f32 %v38, %v60
    %62 = vdwg.mxu0
    %v63 = vxor.u32 %v58, 2147483648
    %v64 = vxor.u32 %v61, 2147483648
    %v65 = vmul.f32 %v63, 1.442695
    %v66 = vpow.pop %v65
    %v67 = vmul.f32 %v64, 1.442695
    %v68 = vpow.pop %v67
    %v69 = vadd.f32 %v66, 1.0
    %v70 = vadd.f32 %v68, 1.0
    %v71 = vrcp.pop %v69
    %v72 = vmul.f32 %v69, %v71
    %v73 = vsub.f32 1.0, %v72
    %v74 = vmul.f32 %v71, %v73
    %v75 = vadd.f32 %v71, %v74
    %vm76 = vweird.f32 %v69
    %vm77 = vweird.f32 %v71
    %vm78 = vmor %vm76, %vm77
    %v79 = vsel %vm78, %v71, %v75
    %v80 = vand.u32 2147483647, %v69
    %vm81 = vcmp.eq.f32.partialorder %v80, 8.507059e+37
    %v82 = vand.u32 %v69, 2147483648
    %v83 = vor.u32 1.1754944e-38, %v82
    %v84 = vsel %vm81, %v83, %v79
    %v85 = vmul.f32 1.0, %v84
    %v86 = vrcp.pop %v70
    %v87 = vmul.f32 %v70, %v86
    %v88 = vsub.f32 1.0, %v87
    %v89 = vmul.f32 %v86, %v88
    %v90 = vadd.f32 %v86, %v89
    %vm91 = vweird.f32 %v70
    %vm92 = vweird.f32 %v86
    %vm93 = vmor %vm91, %vm92
    %v94 = vsel %vm93, %v86, %v90
    %v95 = vand.u32 2147483647, %v70
    %vm96 = vcmp.eq.f32.partialorder %v95, 8.507059e+37
    %v97 = vand.u32 %v70, 2147483648
    %v98 = vor.u32 1.1754944e-38, %v97
    %v99 = vsel %vm96, %v98, %v94
    %v100 = vmul.f32 1.0, %v99
    %v101 = vld [vmem:[%s3] sm:$0xff]
    %v102 = vld [vmem:[%s3 + $0x8] sm:$0xff]
    %v103 = vld [vmem:[%s3 + $0x10] sm:$0xff]
    %v104 = vld [vmem:[%s3 + $0x18] sm:$0xff]
    %vm105 = vcmask 261120
    %v107 = vsel %vm105, %v85, 0
    %v110 = vsel %vm105, %v100, 0
    %112 = vmatpush.msra.mxu0 0.0
    %113 = vmatpush.msra.mxu0 0.0
    %114 = vmatpush.msra.mxu0 0.0
    %115 = vmatpush.msra.mxu0 0.0
    %116 = vmatpush.msra.mxu0 0.0
    %117 = vmatpush.msra.mxu0 0.0
    %118 = vmatpush.msra.mxu0 0.0
    %119 = vmatpush.msra.mxu0 0.0
    %120 = vmatpush.msra.mxu0 0.0
    %121 = vmatpush.msra.mxu0 0.0
    %122 = vmatpush.msra.mxu0 0.0
    %123 = vmatpush.msra.mxu0 0.0
    %124 = vmatpush.msra.mxu0 %v104
    %125 = vmatpush.msra.mxu0 %v103
    %126 = vmatpush.msra.mxu0 %v102
    %127 = vmatpush.msra.mxu0 %v101
    %128 = vmatmul.f32.gmra.mxu0 %v107
    %v129 = vpop.f32.mrf.mxu0
    %v130 = vadd.f32 0.0, %v129
    %131 = vmatmul.f32.gmra.mxu0 %v110
    %v132 = vpop.f32.mrf.mxu0
    %v133 = vadd.f32 0.0, %v132
    %134 = vdwg.mxu0
    %v135 = vmul.f32 %v18, %v130
    %v136 = vmul.f32 %v19, %v133
    %137 = vst [vmem:[#allocation2] sm:$0xff] %v135
    %138 = vst [vmem:[#allocation2 + $0x8] sm:$0xff] %v136
    // Predicated region
    $region18: #{tpu_custom_call.1} parent=1 // pred_check
      _
    $region19: #{tpu_custom_call.1} parent=1 // pred_check_branch
      %140 = sbr.rel (0) target = $region21
    $region20: #{tpu_custom_call.1} parent=1 // pred_region
      %142 = vsyncadd [#allocation3], 0
      %s143 = sshll.u32 [#allocation2], 4
      %s144 = int_to_ptr.vmem [resolvable:$true] %s143
      %s145 = sshll.u32 %s4, 4
      %s146 = int_to_ptr.hbm [resolvable:$true] %s145
      %151 = dma.vmem_to_hbm [thread:$0]  %s144, 256, %s146, [#allocation3], 128, 128, 8
    $region21: #{tpu_custom_call.1} parent=1 // pred_fallthru
      _
    // Predicated region
    $region22: #{tpu_custom_call.1} parent=1 // pred_check
      _
    $region23: #{tpu_custom_call.1} parent=1 // pred_check_branch
      %153 = sbr.rel (0) target = $region25
    $region24: #{tpu_custom_call.1} parent=1 // pred_region
      %155 = dma.done [#allocation3], 256
    $region25: #{tpu_custom_call.1} parent=1 // pred_fallthru
      _
    %156 = vsyncpa [#allocation3], 1

</llo_original>
